<compile_context>
chip_gen: v7x
topology: tpu7x:2x2x1
jax: 0.10.0
libtpu: 0.0.40
codegen_flags: <defaults>
</compile_context>

<pallas_src>
import jax
import jax.numpy as jnp
from jax.experimental import pallas as pl
from jax.experimental.pallas import tpu as pltpu


def squareplus_kernel(x_ref, o_ref):
    x = x_ref[...].astype(jnp.float32)
    # Reference formula (matches the PyTorch module exactly).
    y = 0.5 * (x + jnp.sqrt(x * x + 4.0))
    o_ref[...] = y.astype(o_ref.dtype)


_LANE_CANDIDATES = (8192, 4096, 2048, 1024, 512, 256, 128)


def _choose_lanes(n: int):
    """Pick a lane width (multiple of 128) dividing n; prefer wide slabs with
    >= 8 rows so tiles stay (8,128)-aligned."""
    for lanes in _LANE_CANDIDATES:
        if n % lanes == 0 and n // lanes >= 8:
            return lanes
    for lanes in _LANE_CANDIDATES:
        if n % lanes == 0:
            return lanes
    return None


def _round_up(v: int, m: int) -> int:
    return ((v + m - 1) // m) * m


def _squareplus_2d(x2d: jax.Array, target_block_bytes: int) -> jax.Array:
    """Run the kernel over a (rows, lanes) slab; lanes is a multiple of 128."""
    rows, lanes = x2d.shape
    itemsize = x2d.dtype.itemsize
    n = rows * lanes
    # Packed-sublane multiple: 8 for f32, 16 for bf16, 32 for int8/fp8.
    sub = max(8, 32 // itemsize)

    # ---- block sizing: large blocks, sublane-packed (or full-extent rows).
    block_elems = max(1, target_block_bytes // itemsize)
    block_rows = max(1, block_elems // lanes)
    if block_rows >= rows:
        block_rows = rows                      # full-extent row dim is always legal
    else:
        block_rows = max(sub, (block_rows // sub) * sub)

    # ---- keep small grids EVEN so v7x megacore shards work equally across
    # its 2 TensorCores (covers the single-block case too).
    grid_n = pl.cdiv(rows, block_rows)
    if grid_n % 2 == 1 and grid_n <= 9 and rows >= 2 * sub:
        cand = max(sub, _round_up(pl.cdiv(rows, grid_n + 1), sub))
        if cand < block_rows and pl.cdiv(rows, cand) % 2 == 0:
            block_rows = cand
    grid = (pl.cdiv(rows, block_rows),)

    return pl.pallas_call(
        squareplus_kernel,
        out_shape=jax.ShapeDtypeStruct((rows, lanes), x2d.dtype),
        grid_spec=pltpu.PrefetchScalarGridSpec(
            num_scalar_prefetch=0,
            grid=grid,
            in_specs=[pl.BlockSpec((block_rows, lanes), lambda i: (i, 0))],
            out_specs=pl.BlockSpec((block_rows, lanes), lambda i: (i, 0)),
        ),
        compiler_params=pltpu.CompilerParams(
            dimension_semantics=("parallel",),
            # 48 MiB: above v5e's 16 MiB scoped default, fits 2x2x8 MiB
            # double-buffered blocks, and stays well under v7x's 64 MiB
            # physical VMEM (do NOT raise to 64 MiB there).
            vmem_limit_bytes=48 * 1024 * 1024,
        ),
        cost_estimate=pl.CostEstimate(
            flops=4 * n,
            transcendentals=n,
            bytes_accessed=2 * n * itemsize,
        ),
    )(x2d)


def _squareplus_jnp(v: jax.Array, out_dtype) -> jax.Array:
    v32 = v.astype(jnp.float32)
    return (0.5 * (v32 + jnp.sqrt(v32 * v32 + 4.0))).astype(out_dtype)


def squareplus(x: jax.Array, *, target_block_bytes: int = 8 * 1024 * 1024) -> jax.Array:
    orig_shape = x.shape
    orig_dtype = x.dtype
    n = x.size
    if n == 0:
        return x

    x_flat = jnp.ravel(x)
    lanes = _choose_lanes(n)

    if lanes is not None:
        # Common path: exact lane-dense reshape, no pad, no tail.
        rows = n // lanes
        out2d = _squareplus_2d(x_flat.reshape(rows, lanes), target_block_bytes)
        return out2d.reshape(orig_shape)

    # Ragged path (n % 128 != 0): kernel on the 128-aligned prefix, tiny jnp
    # op on the <128-element tail, one concat to stitch.  Avoids the old
    # jnp.pad + full-array trailing-slice extra HBM passes.
    rem = n % 128
    n_main = n - rem
    if n_main == 0:
        # Fewer than 128 elements total: kernel launch not worthwhile.
        return _squareplus_jnp(x_flat, orig_dtype).reshape(orig_shape)

    lanes = _choose_lanes(n_main) or 128
    rows = n_main // lanes
    main_out = _squareplus_2d(
        x_flat[:n_main].reshape(rows, lanes), target_block_bytes
    ).reshape(-1)
    tail_out = _squareplus_jnp(x_flat[n_main:], orig_dtype)
    return jnp.concatenate([main_out, tail_out]).reshape(orig_shape)


if __name__ == "__main__":
    key = jax.random.PRNGKey(0)
    x = jax.random.normal(key, (2, 4, 16, 16), dtype=jnp.float32)

    y = squareplus(x)
    jax.block_until_ready(y)

    # Reference check in plain JAX.
    y_ref = 0.5 * (x + jnp.sqrt(x * x + 4.0))
    assert y.shape == x.shape and y.dtype == x.dtype
    assert jnp.allclose(y, y_ref, atol=1e-6, rtol=1e-6)

    print("KERNEL_OK")
</pallas_src>

<mosaic_0001>
module attributes {stable_mosaic.version = 11 : i64} {
  func.func @squareplus_kernel(%arg0: i32, %arg1: memref<8x256xf32, #tpu.memory_space<vmem>>, %arg2: memref<8x256xf32, #tpu.memory_space<vmem>>) attributes {dimension_semantics = [#tpu.dimension_semantics<parallel>], iteration_bounds = array<i64: 1>, scalar_prefetch = 0 : i64, scratch_operands = 0 : i64, tpu.core_type = #tpu.core_type<tc>, window_params = [{transform_indices = @transform_0, window_bounds = array<i64: 8, 256>}, {transform_indices = @transform_1, window_bounds = array<i64: 8, 256>}]} {
    %c0 = arith.constant 0 : index
    %c0_0 = arith.constant 0 : index
    %0 = vector.load %arg1[%c0, %c0_0] : memref<8x256xf32, #tpu.memory_space<vmem>>, vector<8x256xf32>
    %1 = arith.mulf %0, %0 : vector<8x256xf32>
    %cst = arith.constant 4.000000e+00 : f32
    %2 = vector.broadcast %cst : f32 to vector<8x256xf32>
    %3 = arith.addf %1, %2 : vector<8x256xf32>
    %4 = math.sqrt %3 : vector<8x256xf32>
    %5 = arith.addf %0, %4 : vector<8x256xf32>
    %cst_1 = arith.constant 5.000000e-01 : f32
    %6 = vector.broadcast %cst_1 : f32 to vector<8x256xf32>
    %7 = arith.mulf %6, %5 : vector<8x256xf32>
    %c0_2 = arith.constant 0 : index
    %c0_3 = arith.constant 0 : index
    %8 = vector.load %arg2[%c0_2, %c0_3] : memref<8x256xf32, #tpu.memory_space<vmem>>, vector<8x256xf32>
    tpu.vector_store %arg2[%c0_2, %c0_3], %7 {strides = array<i32>} : memref<8x256xf32, #tpu.memory_space<vmem>>, vector<8x256xf32>,
    return
  }
  func.func @transform_0(%arg0: i32) -> (i32, i32) {
    %c0_i32 = arith.constant 0 : i32
    %c0_i32_0 = arith.constant 0 : i32
    return %arg0, %c0_i32 : i32, i32
  }
  func.func @transform_1(%arg0: i32) -> (i32, i32) {
    %c0_i32 = arith.constant 0 : i32
    %c0_i32_0 = arith.constant 0 : i32
    return %arg0, %c0_i32 : i32, i32
  }
}

</mosaic_0001>

<llo_original>
// kernel: tpu_custom_call.1
$region0: #{tpu_custom_call.1}
  #allocation0 [shape = 'u32[]', space=smem, size = 0x4, offset = 0x4, fixed_abs, tag = 'smem constant byte address 0x4 - core index']
  #allocation1 [shape = 'u32[144,128]{1,0:T(1,128)}', space=vmem, size = 0x12000, scoped, tag = 'internal scratch']
  %s0 = inlined_call_operand.hbm [shape: f32[8,256], index: 0, kind: input, shape index: {}]
  %s1 = inlined_call_operand.hbm [shape: f32[8,256], index: 1, kind: output, shape index: {}]
  %s2 = sld [smem:[#allocation0]]
  $region18: #{tpu_custom_call.1} parent=0
    _
  %s4 = ssub.s32 1, %s2
  %s5 = scalar_select 0, %s4, %s2
  $region1: #{tpu_custom_call.1} parent=0
    #allocation2 [shape = 'u8[8192]{0}', space=vmem, size = 0x2000, scoped, tag = 'input window, operand 0, single buffered']
    #allocation3 [shape = 's32[1]{0}', space=sflag, size = 0x4, scoped, tag = 'scoped memory for tpu_custom_call.1']
    #allocation4 [shape = 's32[1]{0}', space=sflag, size = 0x4, scoped, tag = 'scoped memory for tpu_custom_call.1']
    #allocation5 [shape = 'u8[8192]{0}', space=vmem, size = 0x2000, scoped, tag = 'output window, operand 0, single buffered']
    %6 = vsyncpa [#allocation3], 0
    %7 = vsyncpa [#allocation4], 0
    // Predicated region
    $region2: #{tpu_custom_call.1} parent=1 // pred_check
      _
    $region3: #{tpu_custom_call.1} parent=1 // pred_check_branch
      %9 = sbr.rel (0) target = $region5
    $region4: #{tpu_custom_call.1} parent=1 // pred_region
      %s11 = ssub.s32 256, 256
      %12 = vsyncadd [#allocation3], %s11
      %s14 = sshll.u32 [#allocation2], 4
      %s15 = int_to_ptr.vmem [resolvable:$true] %s14
      %17 = dma.hbm_to_vmem [thread:$0]  %s0, 256, %s15, [#allocation3]
    $region5: #{tpu_custom_call.1} parent=1 // pred_fallthru
      _
    // Predicated region
    $region6: #{tpu_custom_call.1} parent=1 // pred_check
      _
    $region7: #{tpu_custom_call.1} parent=1 // pred_check_branch
      %19 = sbr.rel (0) target = $region9
    $region8: #{tpu_custom_call.1} parent=1 // pred_region
      %20 = dma.done [#allocation3], 256
    $region9: #{tpu_custom_call.1} parent=1 // pred_fallthru
      _
    %v21 = vld [vmem:[#allocation2] sm:$0xff]
    %v22 = vld [vmem:[#allocation2 + $0x8] sm:$0xff]
    %v23 = vmul.f32 %v21, %v21
    %v24 = vmul.f32 %v22, %v22
    %v25 = vadd.f32 %v23, 4.0
    %v26 = vadd.f32 %v24, 4.0
    %v27 = vrsqrt.pop %v25
    %v28 = vmul.f32 %v25, %v27
    %vm29 = vcmp.eq.f32.partialorder %v25, inf
    %v30 = vsel %vm29, %v25, %v28
    %vm31 = vcmp.eq.f32.partialorder %v25, 0.0
    %v32 = vand.u32 %v25, 2147483648
    %v33 = vsel %vm31, %v32, %v30
    %v34 = vrsqrt.pop %v26
    %v35 = vmul.f32 %v26, %v34
    %vm36 = vcmp.eq.f32.partialorder %v26, inf
    %v37 = vsel %vm36, %v26, %v35
    %vm38 = vcmp.eq.f32.partialorder %v26, 0.0
    %v39 = vand.u32 %v26, 2147483648
    %v40 = vsel %vm38, %v39, %v37
    %v41 = vadd.f32 %v21, %v33
    %v42 = vadd.f32 %v22, %v40
    %v43 = vmul.f32 %v41, 0.5
    %v44 = vmul.f32 %v42, 0.5
    %45 = vst [vmem:[#allocation5] sm:$0xff] %v43
    %46 = vst [vmem:[#allocation5 + $0x8] sm:$0xff] %v44
    // Predicated region
    $region10: #{tpu_custom_call.1} parent=1 // pred_check
      _
    $region11: #{tpu_custom_call.1} parent=1 // pred_check_branch
      %48 = sbr.rel (0) target = $region13
    $region12: #{tpu_custom_call.1} parent=1 // pred_region
      %s50 = ssub.s32 256, 256
      %51 = vsyncadd [#allocation4], %s50
      %s53 = sshll.u32 [#allocation5], 4
      %s54 = int_to_ptr.vmem [resolvable:$true] %s53
      %56 = dma.vmem_to_hbm [thread:$0]  %s54, 256, %s1, [#allocation4]
    $region13: #{tpu_custom_call.1} parent=1 // pred_fallthru
      _
    // Predicated region
    $region14: #{tpu_custom_call.1} parent=1 // pred_check
      _
    $region15: #{tpu_custom_call.1} parent=1 // pred_check_branch
      %58 = sbr.rel (0) target = $region17
    $region16: #{tpu_custom_call.1} parent=1 // pred_region
      %59 = dma.done [#allocation4], 256
    $region17: #{tpu_custom_call.1} parent=1 // pred_fallthru
      _
    %60 = vsyncpa [#allocation3], 1
    %61 = vsyncpa [#allocation4], 1

</llo_original>
